<compile_context>
chip_gen: v7x
topology: tpu7x:2x2x1
jax: 0.10.0
libtpu: 0.0.40
codegen_flags: <defaults>
</compile_context>

<pallas_src>
import functools

import jax
import jax.numpy as jnp
from jax.experimental import pallas as pl
from jax.experimental.pallas import tpu as pltpu


# --------------------------------------------------------------------------- helpers
def _round_up(x, m):
    return ((x + m - 1) // m) * m


def _pick_row_tile(n, max_tile):
    """Largest dst-row tile <= max_tile that divides n and satisfies the (8,128) rule."""
    if n <= max_tile:
        return n
    t = (max_tile // 8) * 8
    while t >= 8:
        if n % t == 0:
            return t
        t -= 8
    return n  # fallback: single full block (correct, just untiled)


def _tpu_kind():
    try:
        return jax.devices()[0].device_kind.lower()
    except Exception:
        return ""


def _default_use_bf16(kind):
    # bf16-native MXUs: v6e / v7x.  f32 elsewhere (matches reference numerics).
    return any(s in kind for s in ("v6", "v7", "tpu7"))


def _default_vmem_limit(kind):
    if ("v7" in kind) or ("tpu7" in kind):
        return 48 * 1024 * 1024          # 64 MiB physical -> leave scratch headroom
    if any(s in kind for s in ("v5 lite", "v5e", "v5lite", "v6")):
        return 100 * 1024 * 1024         # 128 MiB physical
    return 64 * 1024 * 1024              # conservative fallback


# --------------------------------------------------------------------------- kernels
def _layer1_kernel(matmul_dtype, a1_ref, x_ref, inv_out1_ref, w1_ref, b1_ref,
                   w2_ref, hw2_ref):
    """h = leaky_relu(D_in^-1/2 A1 D_out^-1/2 X W1 + b1); hw2 = h @ W2 (pre-projection)."""
    f32 = jnp.float32
    a1 = a1_ref[...]                                                    # (N1,N1)
    # in-degree norm from the resident block (row sums of raw A1), clamp >= 1
    inv_in1 = jax.lax.rsqrt(jnp.maximum(
        jnp.sum(a1.astype(f32), axis=1, keepdims=True), 1.0))           # (N1,1)
    # out-degree norm fused into the feature operand (no scaled A1 copy)
    xs = (x_ref[...] * inv_out1_ref[...]).astype(matmul_dtype)          # (N1,F)
    agg = jnp.dot(a1, xs, preferred_element_type=f32) * inv_in1         # (N1,F)
    h = jnp.dot(agg.astype(matmul_dtype), w1_ref[...].astype(matmul_dtype),
                preferred_element_type=f32) + b1_ref[...]
    h = jnp.maximum(h, 0.01 * h)                                        # leaky_relu(0.01)
    hw2 = jnp.dot(h.astype(matmul_dtype), w2_ref[...].astype(matmul_dtype),
                  preferred_element_type=f32)                           # (N1, Op)
    hw2_ref[...] = hw2.astype(hw2_ref.dtype)


def _layer2_kernel(n_layers, n1, matmul_dtype, a2_ref, inv_out2_ref, hw2_ref,
                   b2_ref, out_ref):
    """Per dst-row tile of A2: fold kron columns (out-degree scaled), aggregate against
    hw2, apply in-degree norm + bias + leaky_relu."""
    f32 = jnp.float32
    # fold A2 columns with out-degree scaling; accumulate raw row sums for inv_in2,
    # reusing the already-loaded (T, N1) slices -> no full f32 copy of the A2 tile.
    blk = a2_ref[:, 0:n1].astype(f32)                                   # (T, N1)
    rowsum = jnp.sum(blk, axis=1, keepdims=True)                        # raw in-degree
    fold = blk * inv_out2_ref[:, 0:n1]
    for k in range(1, n_layers):                                        # static unroll
        blk = a2_ref[:, k * n1:(k + 1) * n1].astype(f32)
        rowsum = rowsum + jnp.sum(blk, axis=1, keepdims=True)
        fold = fold + blk * inv_out2_ref[:, k * n1:(k + 1) * n1]
    inv_in2 = jax.lax.rsqrt(jnp.maximum(rowsum, 1.0))                   # (T,1)
    z = jnp.dot(fold.astype(matmul_dtype), hw2_ref[...],
                preferred_element_type=f32)                             # (T, Op)
    z = z * inv_in2 + b2_ref[...]
    out_ref[...] = jnp.maximum(z, 0.01 * z)                             # leaky_relu


# --------------------------------------------------------------------------- wrapper
@functools.partial(jax.jit, static_argnames=("n_layers", "use_bf16_matmul",
                                             "vmem_limit", "max_row_tile",
                                             "return_padded"))
def _mbgnn_forward(adj1, adj2, x, w1, b1, w2, b2, *, n_layers, use_bf16_matmul,
                   vmem_limit, max_row_tile, return_padded):
    f32 = jnp.float32
    md = jnp.bfloat16 if use_bf16_matmul else jnp.float32
    md_bytes = 2 if use_bf16_matmul else 4

    n1, f = x.shape
    n2 = adj2.shape[0]
    assert adj1.shape == (n1, n1)
    assert n2 == n_layers * n1, "g2 must have n_layers * |g1| nodes (kron tiling)"
    h_dim = w1.shape[1]
    o_dim = w2.shape[1]
    # Only the tiny W2/b2 params are padded to 128 output lanes so hw2 and the final
    # output are lane-dense (unmasked vst); X / W1 / A stay at natural widths.
    op = _round_up(o_dim, 128)

    # Out-degree norms are global column sums (can't be computed per dst-row tile);
    # precompute them with cheap XLA reductions and feed as vectors.
    inv_out1 = jax.lax.rsqrt(
        jnp.maximum(jnp.sum(adj1.astype(f32), axis=0), 1.0)).reshape(n1, 1)
    inv_out2 = jax.lax.rsqrt(
        jnp.maximum(jnp.sum(adj2.astype(f32), axis=0), 1.0)).reshape(1, n2)

    # Cast adjacencies at the HBM boundary (halves DMA + VMEM in bf16 mode).
    a1_m = adj1.astype(md)
    a2_m = adj2.astype(md)
    x_f = x.astype(f32)
    w1_f = w1.astype(f32)
    b1_f = b1.astype(f32).reshape(1, -1)
    w2_p = jnp.pad(w2.astype(f32), ((0, 0), (0, op - o_dim)))
    b2_p = jnp.pad(b2.astype(f32).reshape(1, -1), ((0, 0), (0, op - o_dim)))

    vmem_full = pl.BlockSpec(memory_space=pltpu.MemorySpace.VMEM)

    # ------------------- call 1: layer-1 GraphConv + W2 pre-projection (small graph)
    # TODO(synk): for very large |g1| this call should also be dst-row tiled.
    cost1 = pl.CostEstimate(
        flops=2 * (n1 * n1 * f + n1 * f * h_dim + n1 * h_dim * op),
        transcendentals=n1,
        bytes_accessed=md_bytes * n1 * (n1 + op)
        + 4 * (n1 * f + n1 + f * h_dim + h_dim + h_dim * op))
    hw2 = pl.pallas_call(
        functools.partial(_layer1_kernel, md),
        out_shape=jax.ShapeDtypeStruct((n1, op), md),
        in_specs=[vmem_full] * 6,
        out_specs=vmem_full,
        compiler_params=pltpu.CompilerParams(vmem_limit_bytes=vmem_limit),
        cost_estimate=cost1,
    )(a1_m, x_f, inv_out1, w1_f, b1_f, w2_p)

    # ------------------- call 2: layer-2 aggregation, gridded over dst-row tiles of A2
    t = _pick_row_tile(n2, max_row_tile)
    grid = (n2 // t,)
    cost2 = pl.CostEstimate(
        flops=2 * n2 * n2 + 2 * n2 * n1 * op,
        transcendentals=n2,
        bytes_accessed=md_bytes * (n2 * n2 + n1 * op) + 4 * (n2 + op + n2 * op))
    out_p = pl.pallas_call(
        functools.partial(_layer2_kernel, n_layers, n1, md),
        out_shape=jax.ShapeDtypeStruct((n2, op), f32),
        grid=grid,
        in_specs=[
            pl.BlockSpec((t, n2), lambda i: (i, 0)),    # A2 dst-row tile (streamed)
            pl.BlockSpec((1, n2), lambda i: (0, 0)),    # inv_out2 (resident)
            pl.BlockSpec((n1, op), lambda i: (0, 0)),   # hw2      (resident)
            pl.BlockSpec((1, op), lambda i: (0, 0)),    # b2       (resident)
        ],
        out_specs=pl.BlockSpec((t, op), lambda i: (i, 0)),
        compiler_params=pltpu.CompilerParams(
            dimension_semantics=("parallel",),
            vmem_limit_bytes=vmem_limit),
        cost_estimate=cost2,
    )(a2_m, inv_out2, hw2, b2_p)

    if return_padded:                       # consumers that accept 128-lane padding
        return out_p                        # can skip the slice copy entirely
    return out_p[:, :o_dim]


def multi_behavioral_gnn(adj1, adj2, x, w1, b1, w2, b2, *, n_layers,
                         use_bf16_matmul=None, max_row_tile=512,
                         return_padded=False):
    kind = _tpu_kind()
    if use_bf16_matmul is None:
        use_bf16_matmul = _default_use_bf16(kind)
    vmem_limit = _default_vmem_limit(kind)
    return _mbgnn_forward(adj1, adj2, x, w1, b1, w2, b2,
                          n_layers=n_layers,
                          use_bf16_matmul=bool(use_bf16_matmul),
                          vmem_limit=int(vmem_limit),
                          max_row_tile=int(max_row_tile),
                          return_padded=bool(return_padded))


# --------------------------------------------------------------------------- demo
if __name__ == "__main__":
    key = jax.random.PRNGKey(0)
    k1, k2, k3, k4, k5 = jax.random.split(key, 5)

    # module_input: node_emb_dim=16, gl_hidden_size=[32, 32], n_layers=2
    N1 = 8
    n_layers = 2
    N2 = n_layers * N1
    node_emb_dim = 16
    gl_hidden_size = [32, 32]

    # deterministic synthetic graphs (dense adjacency, dst x src) and features
    adj1 = (jax.random.uniform(k1, (N1, N1)) < 0.4).astype(jnp.float32)
    adj2 = (jax.random.uniform(k2, (N2, N2)) < 0.3).astype(jnp.float32)
    x = jax.random.normal(k3, (N1, node_emb_dim), dtype=jnp.float32)

    # GraphConv params: xavier_uniform weights, zero bias (DGL reset_parameters)
    lim1 = (6.0 / (node_emb_dim + gl_hidden_size[0])) ** 0.5
    w1 = jax.random.uniform(k4, (node_emb_dim, gl_hidden_size[0]),
                            minval=-lim1, maxval=lim1, dtype=jnp.float32)
    b1 = jnp.zeros((gl_hidden_size[0],), jnp.float32)
    lim2 = (6.0 / (gl_hidden_size[0] + gl_hidden_size[-1])) ** 0.5
    w2 = jax.random.uniform(k5, (gl_hidden_size[0], gl_hidden_size[-1]),
                            minval=-lim2, maxval=lim2, dtype=jnp.float32)
    b2 = jnp.zeros((gl_hidden_size[-1],), jnp.float32)

    out = multi_behavioral_gnn(adj1, adj2, x, w1, b1, w2, b2, n_layers=n_layers)
    jax.block_until_ready(out)
    assert out.shape == (N2, gl_hidden_size[-1]) and out.dtype == jnp.float32

    # pure-JAX f32 reference (DGL GraphConv norm='both' math); loose tol if the
    # device auto-selected bf16 matmul operands (v6e / v7x).
    def _ref():
        def gconv(a, feat, w, b):
            io = jax.lax.rsqrt(jnp.maximum(jnp.sum(a, axis=0), 1.0))
            ii = jax.lax.rsqrt(jnp.maximum(jnp.sum(a, axis=1), 1.0))
            r = (a * io[None, :] * ii[:, None]) @ feat @ w + b
            return jnp.where(r > 0, r, 0.01 * r)
        h = gconv(adj1, x, w1, b1)
        m = jnp.concatenate([h] * n_layers, axis=0)        # kron(ones(L,1), h)
        return gconv(adj2, m, w2, b2)

    used_bf16 = _default_use_bf16(_tpu_kind())
    tol = 5e-2 if used_bf16 else 1e-4
    assert jnp.allclose(out, _ref(), rtol=tol, atol=tol), "mismatch vs JAX reference"

    print("KERNEL_OK")
</pallas_src>

<mosaic_0001>
module attributes {stable_mosaic.version = 11 : i64} {
  func.func @_layer1_kernel(%arg0: memref<8x8xf32, #tpu.memory_space<vmem>>, %arg1: memref<8x16xf32, #tpu.memory_space<vmem>>, %arg2: memref<8x1xf32, #tpu.memory_space<vmem>>, %arg3: memref<16x32xf32, #tpu.memory_space<vmem>>, %arg4: memref<1x32xf32, #tpu.memory_space<vmem>>, %arg5: memref<32x128xf32, #tpu.memory_space<vmem>>, %arg6: memref<8x128xf32, #tpu.memory_space<vmem>>) attributes {dimension_semantics = [], scalar_prefetch = 0 : i64, scratch_operands = 0 : i64, tpu.core_type = #tpu.core_type<tc>} {
    %c0 = arith.constant 0 : index
    %c0_0 = arith.constant 0 : index
    %0 = vector.load %arg0[%c0, %c0_0] : memref<8x8xf32, #tpu.memory_space<vmem>>, vector<8x8xf32>
    %cst = arith.constant dense<0.000000e+00> : vector<8xf32>
    %1 = vector.multi_reduction <add>, %0, %cst [1] : vector<8x8xf32> to vector<8xf32>
    %2 = vector.shape_cast %1 : vector<8xf32> to vector<8x1xf32>
    %cst_1 = arith.constant 1.000000e+00 : f32
    %3 = vector.broadcast %cst_1 : f32 to vector<8x1xf32>
    %4 = arith.maximumf %2, %3 : vector<8x1xf32>
    %5 = math.rsqrt %4 : vector<8x1xf32>
    %c0_2 = arith.constant 0 : index
    %c0_3 = arith.constant 0 : index
    %6 = vector.load %arg1[%c0_2, %c0_3] : memref<8x16xf32, #tpu.memory_space<vmem>>, vector<8x16xf32>
    %c0_4 = arith.constant 0 : index
    %c0_5 = arith.constant 0 : index
    %7 = vector.load %arg2[%c0_4, %c0_5] : memref<8x1xf32, #tpu.memory_space<vmem>>, vector<8x1xf32>
    %8 = vector.broadcast %7 : vector<8x1xf32> to vector<8x16xf32>
    %9 = arith.mulf %6, %8 : vector<8x16xf32>
    %cst_6 = arith.constant dense<0.000000e+00> : vector<8x16xf32>
    %10 = tpu.matmul %0, %9, %cst_6 {dimension_numbers = #tpu.dot_dimension_numbers<[1], [0], [0], [1], [0, 0, 1, 1], [], []>} : vector<8x8xf32>, vector<8x16xf32>, vector<8x16xf32> -> vector<8x16xf32>
    %11 = vector.broadcast %5 : vector<8x1xf32> to vector<8x16xf32>
    %12 = arith.mulf %10, %11 : vector<8x16xf32>
    %c0_7 = arith.constant 0 : index
    %c0_8 = arith.constant 0 : index
    %13 = vector.load %arg3[%c0_7, %c0_8] : memref<16x32xf32, #tpu.memory_space<vmem>>, vector<16x32xf32>
    %cst_9 = arith.constant dense<0.000000e+00> : vector<8x32xf32>
    %14 = tpu.matmul %12, %13, %cst_9 {dimension_numbers = #tpu.dot_dimension_numbers<[1], [0], [0], [1], [0, 0, 1, 1], [], []>} : vector<8x16xf32>, vector<16x32xf32>, vector<8x32xf32> -> vector<8x32xf32>
    %c0_10 = arith.constant 0 : index
    %c0_11 = arith.constant 0 : index
    %15 = vector.load %arg4[%c0_10, %c0_11] : memref<1x32xf32, #tpu.memory_space<vmem>>, vector<1x32xf32>
    %16 = vector.broadcast %15 : vector<1x32xf32> to vector<8x32xf32>
    %17 = arith.addf %14, %16 : vector<8x32xf32>
    %cst_12 = arith.constant 0.00999999977 : f32
    %18 = vector.broadcast %cst_12 : f32 to vector<8x32xf32>
    %19 = arith.mulf %18, %17 : vector<8x32xf32>
    %20 = arith.maximumf %17, %19 : vector<8x32xf32>
    %c0_13 = arith.constant 0 : index
    %c0_14 = arith.constant 0 : index
    %21 = vector.load %arg5[%c0_13, %c0_14] : memref<32x128xf32, #tpu.memory_space<vmem>>, vector<32x128xf32>
    %cst_15 = arith.constant dense<0.000000e+00> : vector<8x128xf32>
    %22 = tpu.matmul %20, %21, %cst_15 {dimension_numbers = #tpu.dot_dimension_numbers<[1], [0], [0], [1], [0, 0, 1, 1], [], []>} : vector<8x32xf32>, vector<32x128xf32>, vector<8x128xf32> -> vector<8x128xf32>
    %c0_16 = arith.constant 0 : index
    %c0_17 = arith.constant 0 : index
    %23 = vector.load %arg6[%c0_16, %c0_17] : memref<8x128xf32, #tpu.memory_space<vmem>>, vector<8x128xf32>
    tpu.vector_store %arg6[%c0_16, %c0_17], %22 {strides = array<i32>} : memref<8x128xf32, #tpu.memory_space<vmem>>, vector<8x128xf32>,
    return
  }
}

module attributes {stable_mosaic.version = 11 : i64} {
  func.func @_layer2_kernel(%arg0: i32, %arg1: memref<16x16xf32, #tpu.memory_space<vmem>>, %arg2: memref<1x16xf32, #tpu.memory_space<vmem>>, %arg3: memref<8x128xf32, #tpu.memory_space<vmem>>, %arg4: memref<1x128xf32, #tpu.memory_space<vmem>>, %arg5: memref<16x128xf32, #tpu.memory_space<vmem>>) attributes {dimension_semantics = [#tpu.dimension_semantics<parallel>], iteration_bounds = array<i64: 1>, scalar_prefetch = 0 : i64, scratch_operands = 0 : i64, tpu.core_type = #tpu.core_type<tc>, window_params = [{transform_indices = @transform_0, window_bounds = array<i64: 16, 16>}, {pipeline_mode = #tpu.pipeline_mode<synchronous>, transform_indices = @transform_1, window_bounds = array<i64: 1, 16>}, {pipeline_mode = #tpu.pipeline_mode<synchronous>, transform_indices = @transform_2, window_bounds = array<i64: 8, 128>}, {pipeline_mode = #tpu.pipeline_mode<synchronous>, transform_indices = @transform_3, window_bounds = array<i64: 1, 128>}, {transform_indices = @transform_4, window_bounds = array<i64: 16, 128>}]} {
    %c0 = arith.constant 0 : index
    %c0_0 = arith.constant 0 : index
    %0 = vector.load %arg1[%c0, %c0_0] : memref<16x16xf32, #tpu.memory_space<vmem>>, vector<16x8xf32>
    %cst = arith.constant dense<0.000000e+00> : vector<16xf32>
    %1 = vector.multi_reduction <add>, %0, %cst [1] : vector<16x8xf32> to vector<16xf32>
    %2 = vector.shape_cast %1 : vector<16xf32> to vector<16x1xf32>
    %c0_1 = arith.constant 0 : index
    %c0_2 = arith.constant 0 : index
    %3 = vector.load %arg2[%c0_1, %c0_2] : memref<1x16xf32, #tpu.memory_space<vmem>>, vector<1x8xf32>
    %4 = vector.broadcast %3 : vector<1x8xf32> to vector<16x8xf32>
    %5 = arith.mulf %0, %4 : vector<16x8xf32>
    %c0_3 = arith.constant 0 : index
    %c8 = arith.constant 8 : index
    %6 = vector.load %arg1[%c0_3, %c8] : memref<16x16xf32, #tpu.memory_space<vmem>>, vector<16x8xf32>
    %cst_4 = arith.constant dense<0.000000e+00> : vector<16xf32>
    %7 = vector.multi_reduction <add>, %6, %cst_4 [1] : vector<16x8xf32> to vector<16xf32>
    %8 = vector.shape_cast %7 : vector<16xf32> to vector<16x1xf32>
    %9 = arith.addf %2, %8 : vector<16x1xf32>
    %c0_5 = arith.constant 0 : index
    %c8_6 = arith.constant 8 : index
    %10 = vector.load %arg2[%c0_5, %c8_6] : memref<1x16xf32, #tpu.memory_space<vmem>>, vector<1x8xf32>
    %11 = vector.broadcast %10 : vector<1x8xf32> to vector<16x8xf32>
    %12 = arith.mulf %6, %11 : vector<16x8xf32>
    %13 = arith.addf %5, %12 : vector<16x8xf32>
    %cst_7 = arith.constant 1.000000e+00 : f32
    %14 = vector.broadcast %cst_7 : f32 to vector<16x1xf32>
    %15 = arith.maximumf %9, %14 : vector<16x1xf32>
    %16 = math.rsqrt %15 : vector<16x1xf32>
    %c0_8 = arith.constant 0 : index
    %c0_9 = arith.constant 0 : index
    %17 = vector.load %arg3[%c0_8, %c0_9] : memref<8x128xf32, #tpu.memory_space<vmem>>, vector<8x128xf32>
    %cst_10 = arith.constant dense<0.000000e+00> : vector<16x128xf32>
    %18 = tpu.matmul %13, %17, %cst_10 {dimension_numbers = #tpu.dot_dimension_numbers<[1], [0], [0], [1], [0, 0, 1, 1], [], []>} : vector<16x8xf32>, vector<8x128xf32>, vector<16x128xf32> -> vector<16x128xf32>
    %19 = vector.broadcast %16 : vector<16x1xf32> to vector<16x128xf32>
    %20 = arith.mulf %18, %19 : vector<16x128xf32>
    %c0_11 = arith.constant 0 : index
    %c0_12 = arith.constant 0 : index
    %21 = vector.load %arg4[%c0_11, %c0_12] : memref<1x128xf32, #tpu.memory_space<vmem>>, vector<1x128xf32>
    %22 = vector.broadcast %21 : vector<1x128xf32> to vector<16x128xf32>
    %23 = arith.addf %20, %22 : vector<16x128xf32>
    %cst_13 = arith.constant 0.00999999977 : f32
    %24 = vector.broadcast %cst_13 : f32 to vector<16x128xf32>
    %25 = arith.mulf %24, %23 : vector<16x128xf32>
    %26 = arith.maximumf %23, %25 : vector<16x128xf32>
    %c0_14 = arith.constant 0 : index
    %c0_15 = arith.constant 0 : index
    %27 = vector.load %arg5[%c0_14, %c0_15] : memref<16x128xf32, #tpu.memory_space<vmem>>, vector<16x128xf32>
    tpu.vector_store %arg5[%c0_14, %c0_15], %26 {strides = array<i32>} : memref<16x128xf32, #tpu.memory_space<vmem>>, vector<16x128xf32>,
    return
  }
  func.func @transform_0(%arg0: i32) -> (i32, i32) {
    %c0_i32 = arith.constant 0 : i32
    %c0_i32_0 = arith.constant 0 : i32
    return %arg0, %c0_i32 : i32, i32
  }
  func.func @transform_1(%arg0: i32) -> (i32, i32) {
    %c0_i32 = arith.constant 0 : i32
    %c0_i32_0 = arith.constant 0 : i32
    %c0_i32_1 = arith.constant 0 : i32
    return %c0_i32, %c0_i32_0 : i32, i32
  }
  func.func @transform_2(%arg0: i32) -> (i32, i32) {
    %c0_i32 = arith.constant 0 : i32
    %c0_i32_0 = arith.constant 0 : i32
    %c0_i32_1 = arith.constant 0 : i32
    return %c0_i32, %c0_i32_0 : i32, i32
  }
  func.func @transform_3(%arg0: i32) -> (i32, i32) {
    %c0_i32 = arith.constant 0 : i32
    %c0_i32_0 = arith.constant 0 : i32
    %c0_i32_1 = arith.constant 0 : i32
    return %c0_i32, %c0_i32_0 : i32, i32
  }
  func.func @transform_4(%arg0: i32) -> (i32, i32) {
    %c0_i32 = arith.constant 0 : i32
    %c0_i32_0 = arith.constant 0 : i32
    return %arg0, %c0_i32 : i32, i32
  }
}

</mosaic_0001>

<llo_original>
// kernel: _mbgnn_forward.3
$region0: #{_mbgnn_forward.3}
  #allocation0 [shape = 'u32[]', space=smem, size = 0x4, offset = 0x4, fixed_abs, tag = 'smem constant byte address 0x4 - core index']
  #allocation1 [shape = 'u32[144,128]{1,0:T(1,128)}', space=vmem, size = 0x12000, scoped, tag = 'internal scratch']
  %s0 = inlined_call_operand.hbm [shape: f32[16,16], index: 0, kind: input, shape index: {}]
  %s1 = inlined_call_operand.hbm [shape: f32[1,16], index: 1, kind: input, shape index: {}]
  %s2 = inlined_call_operand.hbm [shape: f32[8,128], index: 2, kind: input, shape index: {}]
  %s3 = inlined_call_operand.hbm [shape: f32[1,128], index: 3, kind: input, shape index: {}]
  %s4 = inlined_call_operand.hbm [shape: f32[16,128], index: 4, kind: output, shape index: {}]
  %s5 = sld [smem:[#allocation0]]
  $region42: #{_mbgnn_forward.3} parent=0
    _
  %s7 = ssub.s32 1, %s5
  %s8 = scalar_select 0, %s7, %s5
  $region1: #{_mbgnn_forward.3} parent=0
    #allocation2 [shape = 'u8[8192]{0}', space=vmem, size = 0x2000, scoped, tag = 'input window, operand 0, single buffered']
    #allocation3 [shape = 's32[1]{0}', space=sflag, size = 0x4, scoped, tag = 'scoped memory for _mbgnn_forward.3']
    #allocation4 [shape = 's32[1]{0}', space=sflag, size = 0x4, scoped, tag = 'scoped memory for _mbgnn_forward.3']
    #allocation5 [shape = 'u8[512]{0}', space=vmem, size = 0x400, scoped, tag = 'input window, operand 1, single buffered']
    #allocation6 [shape = 's32[1]{0}', space=sflag, size = 0x4, scoped, tag = 'scoped memory for _mbgnn_forward.3']
    #allocation7 [shape = 'u8[4096]{0}', space=vmem, size = 0x1000, scoped, tag = 'input window, operand 2, single buffered']
    #allocation8 [shape = 'u8[512]{0}', space=vmem, size = 0x400, scoped, tag = 'input window, operand 3, single buffered']
    #allocation9 [shape = 's32[1]{0}', space=sflag, size = 0x4, scoped, tag = 'scoped memory for _mbgnn_forward.3']
    #allocation10 [shape = 'u8[8192]{0}', space=vmem, size = 0x2000, scoped, tag = 'output window, operand 0, single buffered']
    %9 = vsyncpa [#allocation3], 0
    %10 = vsyncpa [#allocation6], 0
    %11 = vsyncpa [#allocation9], 0
    %12 = vsyncpa [#allocation4], 0
    // Predicated region
    $region2: #{_mbgnn_forward.3} parent=1 // pred_check
      _
    $region3: #{_mbgnn_forward.3} parent=1 // pred_check_branch
      %14 = sbr.rel (0) target = $region5
    $region4: #{_mbgnn_forward.3} parent=1 // pred_region
      %s16 = ssub.s32 256, 256
      %17 = vsyncadd [#allocation3], %s16
      %s18 = sshll.u32 [#allocation2], 4
      %s19 = int_to_ptr.vmem [resolvable:$true] %s18
      %24 = dma.hbm_to_vmem [thread:$0]  %s0, 256, %s19, [#allocation3], 128, 128, 8
    $region5: #{_mbgnn_forward.3} parent=1 // pred_fallthru
      _
    // Predicated region
    $region6: #{_mbgnn_forward.3} parent=1 // pred_check
      _
    $region7: #{_mbgnn_forward.3} parent=1 // pred_check_branch
      %26 = sbr.rel (0) target = $region9
    $region8: #{_mbgnn_forward.3} parent=1 // pred_region
      %s28 = ssub.s32 16, 16
      %29 = vsyncadd [#allocation6], %s28
      %s31 = sshll.u32 [#allocation5], 4
      %s32 = int_to_ptr.vmem [resolvable:$true] %s31
      %34 = dma.hbm_to_vmem [thread:$0]  %s1, 16, %s32, [#allocation6]
    $region9: #{_mbgnn_forward.3} parent=1 // pred_fallthru
      _
    // Predicated region
    $region10: #{_mbgnn_forward.3} parent=1 // pred_check
      _
    $region11: #{_mbgnn_forward.3} parent=1 // pred_check_branch
      %36 = sbr.rel (0) target = $region13
    $region12: #{_mbgnn_forward.3} parent=1 // pred_region
      %s38 = ssub.s32 128, 128
      %39 = vsyncadd [#allocation6], %s38
      %s41 = sshll.u32 [#allocation7], 4
      %s42 = int_to_ptr.vmem [resolvable:$true] %s41
      %44 = dma.hbm_to_vmem [thread:$0]  %s2, 128, %s42, [#allocation6]
    $region13: #{_mbgnn_forward.3} parent=1 // pred_fallthru
      _
    // Predicated region
    $region14: #{_mbgnn_forward.3} parent=1 // pred_check
      _
    $region15: #{_mbgnn_forward.3} parent=1 // pred_check_branch
      %46 = sbr.rel (0) target = $region17
    $region16: #{_mbgnn_forward.3} parent=1 // pred_region
      %s48 = ssub.s32 16, 16
      %49 = vsyncadd [#allocation9], %s48
      %s51 = sshll.u32 [#allocation8], 4
      %s52 = int_to_ptr.vmem [resolvable:$true] %s51
      %54 = dma.hbm_to_vmem [thread:$0]  %s3, 16, %s52, [#allocation9]
    $region17: #{_mbgnn_forward.3} parent=1 // pred_fallthru
      _
    // Predicated region
    $region18: #{_mbgnn_forward.3} parent=1 // pred_check
      _
    $region19: #{_mbgnn_forward.3} parent=1 // pred_check_branch
      %56 = sbr.rel (0) target = $region21
    $region20: #{_mbgnn_forward.3} parent=1 // pred_region
      %57 = dma.done [#allocation3], 256
    $region21: #{_mbgnn_forward.3} parent=1 // pred_fallthru
      _
    // Predicated region
    $region22: #{_mbgnn_forward.3} parent=1 // pred_check
      _
    $region23: #{_mbgnn_forward.3} parent=1 // pred_check_branch
      %59 = sbr.rel (0) target = $region25
    $region24: #{_mbgnn_forward.3} parent=1 // pred_region
      %60 = dma.done [#allocation6], 16
    $region25: #{_mbgnn_forward.3} parent=1 // pred_fallthru
      _
    // Predicated region
    $region26: #{_mbgnn_forward.3} parent=1 // pred_check
      _
    $region27: #{_mbgnn_forward.3} parent=1 // pred_check_branch
      %62 = sbr.rel (0) target = $region29
    $region28: #{_mbgnn_forward.3} parent=1 // pred_region
      %63 = dma.done [#allocation6], 128
    $region29: #{_mbgnn_forward.3} parent=1 // pred_fallthru
      _
    // Predicated region
    $region30: #{_mbgnn_forward.3} parent=1 // pred_check
      _
    $region31: #{_mbgnn_forward.3} parent=1 // pred_check_branch
      %65 = sbr.rel (0) target = $region33
    $region32: #{_mbgnn_forward.3} parent=1 // pred_region
      %66 = dma.done [#allocation9], 16
    $region33: #{_mbgnn_forward.3} parent=1 // pred_fallthru
      _
    %v67 = vld [vmem:[#allocation2] sm:$0xff]
    %v68 = vld [vmem:[#allocation2 + $0x8] sm:$0xff]
    %vm69 = vcmask 64512
    %v70 = vsel %vm69, %v67, 0.0
    %71 = vadd.xlane.f32.xlu0 %v70
    %v72 = vpop.xlane.xlu0 %71
    %v73 = vsel %vm69, %v68, 0.0
    %74 = vadd.xlane.f32.xlu0 %v73
    %v75 = vpop.xlane.xlu0 %74
    %v76 = vld [vmem:[#allocation5] sm:$0x1]
    %v78 = vlaneseq
    %v79 = vshrl.u32 %v78, 7
    %v80 = vsub.s32 0, %v79
    %v81 = vrot.slane %v76, %v80
    %v83 = vmul.f32 %v67, %v81
    %v84 = vmul.f32 %v68, %v81
    %87 = vrot.lane.b32.xlu0 %v67, 120
    %v88 = vpop.permute.xlu0 %87
    %89 = vrot.lane.b32.xlu0 %v68, 120
    %v90 = vpop.permute.xlu0 %89
    %v93 = vsel %vm69, %v88, 0.0
    %94 = vadd.xlane.f32.xlu0 %v93
    %v95 = vpop.xlane.xlu0 %94
    %v96 = vsel %vm69, %v90, 0.0
    %97 = vadd.xlane.f32.xlu0 %v96
    %v98 = vpop.xlane.xlu0 %97
    %v99 = vadd.f32 %v72, %v95
    %v100 = vadd.f32 %v75, %v98
    %103 = vrot.lane.b32.xlu0 %v83, 120
    %v104 = vpop.permute.xlu0 %103
    %105 = vrot.lane.b32.xlu0 %v84, 120
    %v106 = vpop.permute.xlu0 %105
    %v109 = vadd.f32 %v83, %v104
    %v110 = vadd.f32 %v84, %v106
    %v111 = vmax.f32 %v99, 1.0
    %v112 = vmax.f32 %v100, 1.0
    %v113 = vrsqrt.pop %v111
    %v114 = vrsqrt.pop %v112
    %v115 = vld [vmem:[#allocation7] sm:$0xff]
    %v117 = vsel %vm69, %v109, 0
    %v120 = vsel %vm69, %v110, 0
    %122 = vmatprep.subr.mxu0 0.0
    %123 = vmatpush1.msra.mxu0 %v115
    %124 = vmatprep.subr.mxu0 0.0
    %125 = vmatpush1.msra.mxu0 0.0
    %126 = vmatprep.subr.mxu0 0.0
    %127 = vmatpush1.msra.mxu0 0.0
    %128 = vmatprep.subr.mxu0 0.0
    %129 = vmatpush1.msra.mxu0 0.0
    %130 = vmatprep.subr.mxu0 0.0
    %131 = vmatpush1.msra.mxu0 0.0
    %132 = vmatprep.subr.mxu0 0.0
    %133 = vmatpush1.msra.mxu0 0.0
    %134 = vmatprep.subr.mxu0 0.0
    %135 = vmatpush1.msra.mxu0 0.0
    %136 = vmatprep.subr.mxu0 0.0
    %137 = vmatpush1.msra.mxu0 0.0
    %138 = vmatprep.subr.mxu0 0.0
    %139 = vmatpush1.msra.mxu0 0.0
    %140 = vmatprep.subr.mxu0 0.0
    %141 = vmatpush1.msra.mxu0 0.0
    %142 = vmatprep.subr.mxu0 0.0
    %143 = vmatpush1.msra.mxu0 0.0
    %144 = vmatprep.subr.mxu0 0.0
    %145 = vmatpush1.msra.mxu0 0.0
    %146 = vmatprep.subr.mxu0 0.0
    %147 = vmatpush1.msra.mxu0 0.0
    %148 = vmatprep.subr.mxu0 0.0
    %149 = vmatpush1.msra.mxu0 0.0
    %150 = vmatprep.subr.mxu0 0.0
    %151 = vmatpush1.msra.mxu0 0.0
    %152 = vmatprep.subr.mxu0 0.0
    %153 = vmatpush1.msra.mxu0 0.0
    %154 = vmatprep.subr.mxu0 0.0
    %155 = vmatpush1.msra.mxu0 0.0
    %156 = vmatprep.subr.mxu0 0.0
    %157 = vmatpush1.msra.mxu0 0.0
    %158 = vmatprep.subr.mxu0 0.0
    %159 = vmatpush1.msra.mxu0 0.0
    %160 = vmatprep.subr.mxu0 0.0
    %161 = vmatpush1.msra.mxu0 0.0
    %162 = vmatprep.subr.mxu0 0.0
    %163 = vmatpush1.msra.mxu0 0.0
    %164 = vmatprep.subr.mxu0 0.0
    %165 = vmatpush1.msra.mxu0 0.0
    %166 = vmatprep.subr.mxu0 0.0
    %167 = vmatpush1.msra.mxu0 0.0
    %168 = vmatprep.subr.mxu0 0.0
    %169 = vmatpush1.msra.mxu0 0.0
    %170 = vmatprep.subr.mxu0 0.0
    %171 = vmatpush1.msra.mxu0 0.0
    %172 = vmatprep.subr.mxu0 0.0
    %173 = vmatpush1.msra.mxu0 0.0
    %174 = vmatprep.subr.mxu0 0.0
    %175 = vmatpush1.msra.mxu0 0.0
    %176 = vmatprep.subr.mxu0 0.0
    %177 = vmatpush1.msra.mxu0 0.0
    %178 = vmatprep.subr.mxu0 0.0
    %179 = vmatpush1.msra.mxu0 0.0
    %180 = vmatprep.subr.mxu0 0.0
    %181 = vmatpush1.msra.mxu0 0.0
    %182 = vmatprep.subr.mxu0 0.0
    %183 = vmatpush1.msra.mxu0 0.0
    %184 = vmatprep.subr.mxu0 0.0
    %185 = vmatpush1.msra.mxu0 0.0
    %186 = vmatprep.mubr.f32.mxu0 0.0
    %187 = vmatmul.mubr.f32.gmra.mrb[0].mxu0 %v117
    %v188 = vpop.f32.mrb[0].mxu0
    %v189 = vadd.f32 0.0, %v188
    %v190 = vpop.f32.mrb[0].mxu0
    %191 = vmatprep.mubr.f32.mxu0 0.0
    %192 = vmatmul.mubr.f32.gmra.mrb[0].mxu0 %v120
    %v193 = vpop.f32.mrb[0].mxu0
    %v194 = vadd.f32 0.0, %v193
    %v195 = vpop.f32.mrb[0].mxu0
    %196 = vdwg.mxu0
    %v197 = vmul.f32 %v189, %v113
    %v198 = vmul.f32 %v194, %v114
    %v199 = vld [vmem:[#allocation8] sm:$0x1]
    %v201 = vlaneseq
    %v202 = vshrl.u32 %v201, 7
    %v203 = vsub.s32 0, %v202
    %v204 = vrot.slane %v199, %v203
    %v206 = vadd.f32 %v197, %v204
    %v207 = vadd.f32 %v198, %v204
    %v208 = vmul.f32 %v206, 0.01
    %v209 = vmul.f32 %v207, 0.01
    %v210 = vmax.f32 %v206, %v208
    %v211 = vmax.f32 %v207, %v209
    %212 = vst [vmem:[#allocation10] sm:$0xff] %v210
    %213 = vst [vmem:[#allocation10 + $0x8] sm:$0xff] %v211
    // Predicated region
    $region34: #{_mbgnn_forward.3} parent=1 // pred_check
      _
    $region35: #{_mbgnn_forward.3} parent=1 // pred_check_branch
      %215 = sbr.rel (0) target = $region37
    $region36: #{_mbgnn_forward.3} parent=1 // pred_region
      %s217 = ssub.s32 256, 256
      %218 = vsyncadd [#allocation4], %s217
      %s219 = sshll.u32 [#allocation10], 4
      %s220 = int_to_ptr.vmem [resolvable:$true] %s219
      %225 = dma.vmem_to_hbm [thread:$0]  %s220, 256, %s4, [#allocation4], 128, 128, 8
    $region37: #{_mbgnn_forward.3} parent=1 // pred_fallthru
      _
    // Predicated region
    $region38: #{_mbgnn_forward.3} parent=1 // pred_check
      _
    $region39: #{_mbgnn_forward.3} parent=1 // pred_check_branch
      %227 = sbr.rel (0) target = $region41
    $region40: #{_mbgnn_forward.3} parent=1 // pred_region
      %228 = dma.done [#allocation4], 256
    $region41: #{_mbgnn_forward.3} parent=1 // pred_fallthru
      _
    %229 = vsyncpa [#allocation3], 1
    %230 = vsyncpa [#allocation6], 1
    %231 = vsyncpa [#allocation9], 1
    %232 = vsyncpa [#allocation4], 1

// kernel: _mbgnn_forward.2
$region0: #{_mbgnn_forward.2}
  #allocation0 [shape = 'u32[]', space=smem, size = 0x4, offset = 0x4, fixed_abs, tag = 'smem constant byte address 0x4 - core index']
  #allocation1 [shape = 'u32[144,128]{1,0:T(1,128)}', space=vmem, size = 0x12000, scoped, tag = 'internal scratch']
  %s0 = inlined_call_operand.hbm [shape: f32[8,8], index: 0, kind: input, shape index: {}]
  %s1 = inlined_call_operand.hbm [shape: f32[8,16], index: 1, kind: input, shape index: {}]
  %s2 = inlined_call_operand.hbm [shape: f32[8,1], index: 2, kind: input, shape index: {}]
  %s3 = inlined_call_operand.hbm [shape: f32[16,32], index: 3, kind: input, shape index: {}]
  %s4 = inlined_call_operand.hbm [shape: f32[1,32], index: 4, kind: input, shape index: {}]
  %s5 = inlined_call_operand.hbm [shape: f32[32,128], index: 5, kind: input, shape index: {}]
  %s6 = inlined_call_operand.hbm [shape: f32[8,128], index: 6, kind: output, shape index: {}]
  %s7 = sld [smem:[#allocation0]]
  $region58: #{_mbgnn_forward.2} parent=0
    _
  %s9 = ssub.s32 1, %s7
  %s10 = scalar_select 0, %s9, %s7
  $region1: #{_mbgnn_forward.2} parent=0
    #allocation2 [shape = 'u8[4096]{0}', space=vmem, size = 0x1000, scoped, tag = 'input window, operand 0, single buffered']
    #allocation3 [shape = 's32[1]{0}', space=sflag, size = 0x4, scoped, tag = 'scoped memory for _mbgnn_forward.2']
    #allocation4 [shape = 's32[1]{0}', space=sflag, size = 0x4, scoped, tag = 'scoped memory for _mbgnn_forward.2']
    #allocation5 [shape = 'u8[4096]{0}', space=vmem, size = 0x1000, scoped, tag = 'input window, operand 1, single buffered']
    #allocation6 [shape = 's32[1]{0}', space=sflag, size = 0x4, scoped, tag = 'scoped memory for _mbgnn_forward.2']
    #allocation7 [shape = 'u8[4096]{0}', space=vmem, size = 0x1000, scoped, tag = 'input window, operand 2, single buffered']
    #allocation8 [shape = 'u8[8192]{0}', space=vmem, size = 0x2000, scoped, tag = 'input window, operand 3, single buffered']
    #allocation9 [shape = 's32[1]{0}', space=sflag, size = 0x4, scoped, tag = 'scoped memory for _mbgnn_forward.2']
    #allocation10 [shape = 'u8[512]{0}', space=vmem, size = 0x400, scoped, tag = 'input window, operand 4, single buffered']
    #allocation11 [shape = 'u8[16384]{0}', space=vmem, size = 0x4000, scoped, tag = 'input window, operand 5, single buffered']
    #allocation12 [shape = 's32[1]{0}', space=sflag, size = 0x4, scoped, tag = 'scoped memory for _mbgnn_forward.2']
    #allocation13 [shape = 'u8[4096]{0}', space=vmem, size = 0x1000, scoped, tag = 'output window, operand 0, single buffered']
    %11 = vsyncpa [#allocation3], 0
    %12 = vsyncpa [#allocation6], 0
    %13 = vsyncpa [#allocation9], 0
    %14 = vsyncpa [#allocation12], 0
    %15 = vsyncpa [#allocation4], 0
    // Predicated region
    $region2: #{_mbgnn_forward.2} parent=1 // pred_check
      _
    $region3: #{_mbgnn_forward.2} parent=1 // pred_check_branch
      %17 = sbr.rel (0) target = $region5
    $region4: #{_mbgnn_forward.2} parent=1 // pred_region
      %s19 = ssub.s32 128, 128
      %20 = vsyncadd [#allocation3], %s19
      %s22 = sshll.u32 [#allocation2], 4
      %s23 = int_to_ptr.vmem [resolvable:$true] %s22
      %25 = dma.hbm_to_vmem [thread:$0]  %s0, 128, %s23, [#allocation3]
    $region5: #{_mbgnn_forward.2} parent=1 // pred_fallthru
      _
    // Predicated region
    $region6: #{_mbgnn_forward.2} parent=1 // pred_check
      _
    $region7: #{_mbgnn_forward.2} parent=1 // pred_check_branch
      %27 = sbr.rel (0) target = $region9
    $region8: #{_mbgnn_forward.2} parent=1 // pred_region
      %s29 = ssub.s32 128, 128
      %30 = vsyncadd [#allocation6], %s29
      %s32 = sshll.u32 [#allocation5], 4
      %s33 = int_to_ptr.vmem [resolvable:$true] %s32
      %35 = dma.hbm_to_vmem [thread:$0]  %s1, 128, %s33, [#allocation6]
    $region9: #{_mbgnn_forward.2} parent=1 // pred_fallthru
      _
    // Predicated region
    $region10: #{_mbgnn_forward.2} parent=1 // pred_check
      _
    $region11: #{_mbgnn_forward.2} parent=1 // pred_check_branch
      %37 = sbr.rel (0) target = $region13
    $region12: #{_mbgnn_forward.2} parent=1 // pred_region
      %s39 = ssub.s32 128, 128
      %40 = vsyncadd [#allocation6], %s39
      %s42 = sshll.u32 [#allocation7], 4
      %s43 = int_to_ptr.vmem [resolvable:$true] %s42
      %45 = dma.hbm_to_vmem [thread:$0]  %s2, 128, %s43, [#allocation6]
    $region13: #{_mbgnn_forward.2} parent=1 // pred_fallthru
      _
    // Predicated region
    $region14: #{_mbgnn_forward.2} parent=1 // pred_check
      _
    $region15: #{_mbgnn_forward.2} parent=1 // pred_check_branch
      %47 = sbr.rel (0) target = $region17
    $region16: #{_mbgnn_forward.2} parent=1 // pred_region
      %s49 = ssub.s32 256, 256
      %50 = vsyncadd [#allocation9], %s49
      %s51 = sshll.u32 [#allocation8], 4
      %s52 = int_to_ptr.vmem [resolvable:$true] %s51
      %57 = dma.hbm_to_vmem [thread:$0]  %s3, 256, %s52, [#allocation9], 128, 128, 8
    $region17: #{_mbgnn_forward.2} parent=1 // pred_fallthru
      _
    // Predicated region
    $region18: #{_mbgnn_forward.2} parent=1 // pred_check
      _
    $region19: #{_mbgnn_forward.2} parent=1 // pred_check_branch
      %59 = sbr.rel (0) target = $region21
    $region20: #{_mbgnn_forward.2} parent=1 // pred_region
      %s61 = ssub.s32 16, 16
      %62 = vsyncadd [#allocation9], %s61
      %s64 = sshll.u32 [#allocation10], 4
      %s65 = int_to_ptr.vmem [resolvable:$true] %s64
      %67 = dma.hbm_to_vmem [thread:$0]  %s4, 16, %s65, [#allocation9]
    $region21: #{_mbgnn_forward.2} parent=1 // pred_fallthru
      _
    // Predicated region
    $region22: #{_mbgnn_forward.2} parent=1 // pred_check
      _
    $region23: #{_mbgnn_forward.2} parent=1 // pred_check_branch
      %69 = sbr.rel (0) target = $region25
    $region24: #{_mbgnn_forward.2} parent=1 // pred_region
      %s71 = ssub.s32 512, 512
      %72 = vsyncadd [#allocation12], %s71
      %s73 = sshll.u32 [#allocation11], 4
      %s74 = int_to_ptr.vmem [resolvable:$true] %s73
      %79 = dma.hbm_to_vmem [thread:$0]  %s5, 512, %s74, [#allocation12], 128, 128, 8
    $region25: #{_mbgnn_forward.2} parent=1 // pred_fallthru
      _
    // Predicated region
    $region26: #{_mbgnn_forward.2} parent=1 // pred_check
      _
    $region27: #{_mbgnn_forward.2} parent=1 // pred_check_branch
      %81 = sbr.rel (0) target = $region29
    $region28: #{_mbgnn_forward.2} parent=1 // pred_region
      %82 = dma.done [#allocation3], 128
    $region29: #{_mbgnn_forward.2} parent=1 // pred_fallthru
      _
    // Predicated region
    $region30: #{_mbgnn_forward.2} parent=1 // pred_check
      _
    $region31: #{_mbgnn_forward.2} parent=1 // pred_check_branch
      %84 = sbr.rel (0) target = $region33
    $region32: #{_mbgnn_forward.2} parent=1 // pred_region
      %85 = dma.done [#allocation6], 128
    $region33: #{_mbgnn_forward.2} parent=1 // pred_fallthru
      _
    // Predicated region
    $region34: #{_mbgnn_forward.2} parent=1 // pred_check
      _
    $region35: #{_mbgnn_forward.2} parent=1 // pred_check_branch
      %87 = sbr.rel (0) target = $region37
    $region36: #{_mbgnn_forward.2} parent=1 // pred_region
      %88 = dma.done [#allocation6], 128
    $region37: #{_mbgnn_forward.2} parent=1 // pred_fallthru
      _
    // Predicated region
    $region38: #{_mbgnn_forward.2} parent=1 // pred_check
      _
    $region39: #{_mbgnn_forward.2} parent=1 // pred_check_branch
      %90 = sbr.rel (0) target = $region41
    $region40: #{_mbgnn_forward.2} parent=1 // pred_region
      %91 = dma.done [#allocation9], 256
    $region41: #{_mbgnn_forward.2} parent=1 // pred_fallthru
      _
    // Predicated region
    $region42: #{_mbgnn_forward.2} parent=1 // pred_check
      _
    $region43: #{_mbgnn_forward.2} parent=1 // pred_check_branch
      %93 = sbr.rel (0) target = $region45
    $region44: #{_mbgnn_forward.2} parent=1 // pred_region
      %94 = dma.done [#allocation9], 16
    $region45: #{_mbgnn_forward.2} parent=1 // pred_fallthru
      _
    // Predicated region
    $region46: #{_mbgnn_forward.2} parent=1 // pred_check
      _
    $region47: #{_mbgnn_forward.2} parent=1 // pred_check_branch
      %96 = sbr.rel (0) target = $region49
    $region48: #{_mbgnn_forward.2} parent=1 // pred_region
      %97 = dma.done [#allocation12], 512
    $region49: #{_mbgnn_forward.2} parent=1 // pred_fallthru
      _
    %v98 = vld [vmem:[#allocation2] sm:$0xff]
    %vm99 = vcmask 64512
    %v100 = vsel %vm99, %v98, 0.0
    %101 = vadd.xlane.f32.xlu0 %v100
    %v102 = vpop.xlane.xlu0 %101
    %v103 = vmax.f32 %v102, 1.0
    %v104 = vrsqrt.pop %v103
    %v105 = vld [vmem:[#allocation5] sm:$0xff]
    %v106 = vld [vmem:[#allocation7] sm:$0xff]
    %108 = vset.pattern.permute.xlu0 0
    %109 = vperm.xlu0 %108, %v106
    %v110 = vpop.permute.xlu0 %109
    %v112 = vmul.f32 %v105, %v110
    %v114 = vsel %vm99, %v98, 0
    %116 = vmatprep.subr.mxu0 0.0
    %117 = vmatpush1.msra.mxu0 %v112
    %118 = vmatprep.subr.mxu0 0.0
    %119 = vmatpush1.msra.mxu0 0.0
    %120 = vmatprep.subr.mxu0 0.0
    %121 = vmatpush1.msra.mxu0 0.0
    %122 = vmatprep.subr.mxu0 0.0
    %123 = vmatpush1.msra.mxu0 0.0
    %124 = vmatprep.subr.mxu0 0.0
    %125 = vmatpush1.msra.mxu0 0.0
    %126 = vmatprep.subr.mxu0 0.0
    %127 = vmatpush1.msra.mxu0 0.0
    %128 = vmatprep.subr.mxu0 0.0
    %129 = vmatpush1.msra.mxu0 0.0
    %130 = vmatprep.subr.mxu0 0.0
    %131 = vmatpush1.msra.mxu0 0.0
    %132 = vmatprep.subr.mxu0 0.0
    %133 = vmatpush1.msra.mxu0 0.0
    %134 = vmatprep.subr.mxu0 0.0
    %135 = vmatpush1.msra.mxu0 0.0
    %136 = vmatprep.subr.mxu0 0.0
    %137 = vmatpush1.msra.mxu0 0.0
    %138 = vmatprep.subr.mxu0 0.0
    %139 = vmatpush1.msra.mxu0 0.0
    %140 = vmatprep.subr.mxu0 0.0
    %141 = vmatpush1.msra.mxu0 0.0
    %142 = vmatprep.subr.mxu0 0.0
    %143 = vmatpush1.msra.mxu0 0.0
    %144 = vmatprep.subr.mxu0 0.0
    %145 = vmatpush1.msra.mxu0 0.0
    %146 = vmatprep.subr.mxu0 0.0
    %147 = vmatpush1.msra.mxu0 0.0
    %148 = vmatprep.subr.mxu0 0.0
    %149 = vmatpush1.msra.mxu0 0.0
    %150 = vmatprep.subr.mxu0 0.0
    %151 = vmatpush1.msra.mxu0 0.0
    %152 = vmatprep.subr.mxu0 0.0
    %153 = vmatpush1.msra.mxu0 0.0
    %154 = vmatprep.subr.mxu0 0.0
    %155 = vmatpush1.msra.mxu0 0.0
    %156 = vmatprep.subr.mxu0 0.0
    %157 = vmatpush1.msra.mxu0 0.0
    %158 = vmatprep.subr.mxu0 0.0
    %159 = vmatpush1.msra.mxu0 0.0
    %160 = vmatprep.subr.mxu0 0.0
    %161 = vmatpush1.msra.mxu0 0.0
    %162 = vmatprep.subr.mxu0 0.0
    %163 = vmatpush1.msra.mxu0 0.0
    %164 = vmatprep.subr.mxu0 0.0
    %165 = vmatpush1.msra.mxu0 0.0
    %166 = vmatprep.subr.mxu0 0.0
    %167 = vmatpush1.msra.mxu0 0.0
    %168 = vmatprep.subr.mxu0 0.0
    %169 = vmatpush1.msra.mxu0 0.0
    %170 = vmatprep.subr.mxu0 0.0
    %171 = vmatpush1.msra.mxu0 0.0
    %172 = vmatprep.subr.mxu0 0.0
    %173 = vmatpush1.msra.mxu0 0.0
    %174 = vmatprep.subr.mxu0 0.0
    %175 = vmatpush1.msra.mxu0 0.0
    %176 = vmatprep.subr.mxu0 0.0
    %177 = vmatpush1.msra.mxu0 0.0
    %178 = vmatprep.subr.mxu0 0.0
    %179 = vmatpush1.msra.mxu0 0.0
    %180 = vmatprep.mubr.f32.mxu0 0.0
    %181 = vmatmul.mubr.f32.gmra.mrb[0].mxu0 %v114
    %v182 = vpop.f32.mrb[0].mxu0
    %v183 = vadd.f32 0.0, %v182
    %v184 = vpop.f32.mrb[0].mxu0
    %185 = vdwg.mxu0
    %v186 = vmul.f32 %v183, %v104
    %v187 = vld [vmem:[#allocation8] sm:$0xff]
    %v188 = vld [vmem:[#allocation8 + $0x8] sm:$0xff]
    %v189 = vld [vmem:[#allocation10] sm:$0x1]
    %v191 = vlaneseq
    %v192 = vshrl.u32 %v191, 7
    %v193 = vsub.s32 0, %v192
    %v194 = vrot.slane %v189, %v193
    %vm196 = vcmask 130048
    %v198 = vsel %vm196, %v186, 0
    %200 = vmatprep.subr.mxu0 0.0
    %201 = vmatpush1.msra.mxu0 %v187
    %202 = vmatprep.subr.mxu0 0.0
    %203 = vmatpush1.msra.mxu0 %v188
    %204 = vmatprep.subr.mxu0 0.0
    %205 = vmatpush1.msra.mxu0 0.0
    %206 = vmatprep.subr.mxu0 0.0
    %207 = vmatpush1.msra.mxu0 0.0
    %208 = vmatprep.subr.mxu0 0.0
    %209 = vmatpush1.msra.mxu0 0.0
    %210 = vmatprep.subr.mxu0 0.0
    %211 = vmatpush1.msra.mxu0 0.0
    %212 = vmatprep.subr.mxu0 0.0
    %213 = vmatpush1.msra.mxu0 0.0
    %214 = vmatprep.subr.mxu0 0.0
    %215 = vmatpush1.msra.mxu0 0.0
    %216 = vmatprep.subr.mxu0 0.0
    %217 = vmatpush1.msra.mxu0 0.0
    %218 = vmatprep.subr.mxu0 0.0
    %219 = vmatpush1.msra.mxu0 0.0
    %220 = vmatprep.subr.mxu0 0.0
    %221 = vmatpush1.msra.mxu0 0.0
    %222 = vmatprep.subr.mxu0 0.0
    %223 = vmatpush1.msra.mxu0 0.0
    %224 = vmatprep.subr.mxu0 0.0
    %225 = vmatpush1.msra.mxu0 0.0
    %226 = vmatprep.subr.mxu0 0.0
    %227 = vmatpush1.msra.mxu0 0.0
    %228 = vmatprep.subr.mxu0 0.0
    %229 = vmatpush1.msra.mxu0 0.0
    %230 = vmatprep.subr.mxu0 0.0
    %231 = vmatpush1.msra.mxu0 0.0
    %232 = vmatprep.subr.mxu0 0.0
    %233 = vmatpush1.msra.mxu0 0.0
    %234 = vmatprep.subr.mxu0 0.0
    %235 = vmatpush1.msra.mxu0 0.0
    %236 = vmatprep.subr.mxu0 0.0
    %237 = vmatpush1.msra.mxu0 0.0
    %238 = vmatprep.subr.mxu0 0.0
    %239 = vmatpush1.msra.mxu0 0.0
    %240 = vmatprep.subr.mxu0 0.0
    %241 = vmatpush1.msra.mxu0 0.0
    %242 = vmatprep.subr.mxu0 0.0
    %243 = vmatpush1.msra.mxu0 0.0
    %244 = vmatprep.subr.mxu0 0.0
    %245 = vmatpush1.msra.mxu0 0.0
    %246 = vmatprep.subr.mxu0 0.0
    %247 = vmatpush1.msra.mxu0 0.0
    %248 = vmatprep.subr.mxu0 0.0
    %249 = vmatpush1.msra.mxu0 0.0
    %250 = vmatprep.subr.mxu0 0.0
    %251 = vmatpush1.msra.mxu0 0.0
    %252 = vmatprep.subr.mxu0 0.0
    %253 = vmatpush1.msra.mxu0 0.0
    %254 = vmatprep.subr.mxu0 0.0
    %255 = vmatpush1.msra.mxu0 0.0
    %256 = vmatprep.subr.mxu0 0.0
    %257 = vmatpush1.msra.mxu0 0.0
    %258 = vmatprep.subr.mxu0 0.0
    %259 = vmatpush1.msra.mxu0 0.0
    %260 = vmatprep.subr.mxu0 0.0
    %261 = vmatpush1.msra.mxu0 0.0
    %262 = vmatprep.subr.mxu0 0.0
    %263 = vmatpush1.msra.mxu0 0.0
    %264 = vmatprep.mubr.f32.mxu0 0.0
    %265 = vmatmul.mubr.f32.gmra.mrb[0].mxu0 %v198
    %v266 = vpop.f32.mrb[0].mxu0
    %v267 = vadd.f32 %v194, %v266
    %v268 = vpop.f32.mrb[0].mxu0
    %269 = vdwg.mxu0
    %v270 = vmul.f32 %v267, 0.01
    %v271 = vmax.f32 %v267, %v270
    %v272 = vld [vmem:[#allocation11] sm:$0xff]
    %v273 = vld [vmem:[#allocation11 + $0x8] sm:$0xff]
    %v274 = vld [vmem:[#allocation11 + $0x10] sm:$0xff]
    %v275 = vld [vmem:[#allocation11 + $0x18] sm:$0xff]
    %vm276 = vcmask 261120
    %v278 = vsel %vm276, %v271, 0
    %280 = vmatprep.subr.mxu0 0.0
    %281 = vmatpush1.msra.mxu0 %v272
    %282 = vmatprep.subr.mxu0 0.0
    %283 = vmatpush1.msra.mxu0 %v273
    %284 = vmatprep.subr.mxu0 0.0
    %285 = vmatpush1.msra.mxu0 %v274
    %286 = vmatprep.subr.mxu0 0.0
    %287 = vmatpush1.msra.mxu0 %v275
    %288 = vmatprep.subr.mxu0 0.0
    %289 = vmatpush1.msra.mxu0 0.0
    %290 = vmatprep.subr.mxu0 0.0
    %291 = vmatpush1.msra.mxu0 0.0
    %292 = vmatprep.subr.mxu0 0.0
    %293 = vmatpush1.msra.mxu0 0.0
    %294 = vmatprep.subr.mxu0 0.0
    %295 = vmatpush1.msra.mxu0 0.0
    %296 = vmatprep.subr.mxu0 0.0
    %297 = vmatpush1.msra.mxu0 0.0
    %298 = vmatprep.subr.mxu0 0.0
    %299 = vmatpush1.msra.mxu0 0.0
    %300 = vmatprep.subr.mxu0 0.0
    %301 = vmatpush1.msra.mxu0 0.0
    %302 = vmatprep.subr.mxu0 0.0
    %303 = vmatpush1.msra.mxu0 0.0
    %304 = vmatprep.subr.mxu0 0.0
    %305 = vmatpush1.msra.mxu0 0.0
    %306 = vmatprep.subr.mxu0 0.0
    %307 = vmatpush1.msra.mxu0 0.0
    %308 = vmatprep.subr.mxu0 0.0
    %309 = vmatpush1.msra.mxu0 0.0
    %310 = vmatprep.subr.mxu0 0.0
    %311 = vmatpush1.msra.mxu0 0.0
    %312 = vmatprep.subr.mxu0 0.0
    %313 = vmatpush1.msra.mxu0 0.0
    %314 = vmatprep.subr.mxu0 0.0
    %315 = vmatpush1.msra.mxu0 0.0
    %316 = vmatprep.subr.mxu0 0.0
    %317 = vmatpush1.msra.mxu0 0.0
    %318 = vmatprep.subr.mxu0 0.0
    %319 = vmatpush1.msra.mxu0 0.0
    %320 = vmatprep.subr.mxu0 0.0
    %321 = vmatpush1.msra.mxu0 0.0
    %322 = vmatprep.subr.mxu0 0.0
    %323 = vmatpush1.msra.mxu0 0.0
    %324 = vmatprep.subr.mxu0 0.0
    %325 = vmatpush1.msra.mxu0 0.0
    %326 = vmatprep.subr.mxu0 0.0
    %327 = vmatpush1.msra.mxu0 0.0
    %328 = vmatprep.subr.mxu0 0.0
    %329 = vmatpush1.msra.mxu0 0.0
    %330 = vmatprep.subr.mxu0 0.0
    %331 = vmatpush1.msra.mxu0 0.0
    %332 = vmatprep.subr.mxu0 0.0
    %333 = vmatpush1.msra.mxu0 0.0
    %334 = vmatprep.subr.mxu0 0.0
    %335 = vmatpush1.msra.mxu0 0.0
    %336 = vmatprep.subr.mxu0 0.0
    %337 = vmatpush1.msra.mxu0 0.0
    %338 = vmatprep.subr.mxu0 0.0
    %339 = vmatpush1.msra.mxu0 0.0
    %340 = vmatprep.subr.mxu0 0.0
    %341 = vmatpush1.msra.mxu0 0.0
    %342 = vmatprep.subr.mxu0 0.0
    %343 = vmatpush1.msra.mxu0 0.0
    %344 = vmatprep.mubr.f32.mxu0 0.0
    %345 = vmatmul.mubr.f32.gmra.mrb[0].mxu0 %v278
    %v346 = vpop.f32.mrb[0].mxu0
    %v347 = vadd.f32 0.0, %v346
    %v348 = vpop.f32.mrb[0].mxu0
    %349 = vdwg.mxu0
    %350 = vst [vmem:[#allocation13] sm:$0xff] %v347
    // Predicated region
    $region50: #{_mbgnn_forward.2} parent=1 // pred_check
      _
    $region51: #{_mbgnn_forward.2} parent=1 // pred_check_branch
      %352 = sbr.rel (0) target = $region53
    $region52: #{_mbgnn_forward.2} parent=1 // pred_region
      %s354 = ssub.s32 128, 128
      %355 = vsyncadd [#allocation4], %s354
      %s357 = sshll.u32 [#allocation13], 4
      %s358 = int_to_ptr.vmem [resolvable:$true] %s357
      %360 = dma.vmem_to_hbm [thread:$0]  %s358, 128, %s6, [#allocation4]
    $region53: #{_mbgnn_forward.2} parent=1 // pred_fallthru
      _
    // Predicated region
    $region54: #{_mbgnn_forward.2} parent=1 // pred_check
      _
    $region55: #{_mbgnn_forward.2} parent=1 // pred_check_branch
      %362 = sbr.rel (0) target = $region57
    $region56: #{_mbgnn_forward.2} parent=1 // pred_region
      %363 = dma.done [#allocation4], 128
    $region57: #{_mbgnn_forward.2} parent=1 // pred_fallthru
      _
    %364 = vsyncpa [#allocation3], 1
    %365 = vsyncpa [#allocation6], 1
    %366 = vsyncpa [#allocation9], 1
    %367 = vsyncpa [#allocation12], 1
    %368 = vsyncpa [#allocation4], 1

</llo_original>
